<compile_context>
chip_gen: v7x
topology: tpu7x:2x2x1
jax: 0.10.0
libtpu: 0.0.40
codegen_flags: <defaults>
</compile_context>

<pallas_src>
import functools

import jax
import jax.numpy as jnp
from jax.experimental import pallas as pl
from jax.experimental.pallas import tpu as pltpu


def _ce_ls_kernel(xT_ref, t_ref, o_ref, *, epsilon, n_valid, tile_cols, needs_mask):
    """One batch tile (batch along lanes, classes along sublanes).

    xT_ref : (C, TB)  logits tile (class-major / transposed)
    t_ref  : (1, TB)  integer target tile (any integer dtype; widened here)
    o_ref  : (1, 128) float32 per-tile partial-sum block (lane 0 holds the sum)
    """
    xT = xT_ref[...].astype(jnp.float32)                      # (C, TB)
    c, tb = xT.shape
    t = t_ref[...].astype(jnp.int32)                          # (1, TB)

    # log-softmax pieces along the class (sublane) axis.
    m = jnp.max(xT, axis=0, keepdims=True)                    # (1, TB)
    lse = jnp.log(jnp.sum(jnp.exp(xT - m), axis=0, keepdims=True))
    z = m + lse                                               # log-normalizer

    sum_x = jnp.sum(xT, axis=0, keepdims=True)                # (1, TB)
    cls = jax.lax.broadcasted_iota(jnp.int32, (c, tb), 0)
    x_t = jnp.sum(jnp.where(cls == t, xT, 0.0), axis=0, keepdims=True)

    lp_t = x_t - z                     # log_prob at the target class
    sum_lp = sum_x - c * z             # sum of log_prob over all classes

    on = jnp.float32(1.0 - epsilon)
    off = jnp.float32(epsilon / (c - 1.0)) if c > 1 else jnp.float32(0.0)
    loss = -((on - off) * lp_t + off * sum_lp)                # (1, TB)

    if needs_mask:
        # Only emitted when n % tile_cols != 0. Out-of-bounds edge-block data
        # (including any Inf/NaN it produced above) is confined to its own
        # columns and dropped here by the select, never by a multiply.
        step = pl.program_id(0)
        col = jax.lax.broadcasted_iota(jnp.int32, (1, tb), 1) + step * tile_cols
        loss = jnp.where(col < n_valid, loss, 0.0)

    partial = jnp.sum(loss)
    lane = jax.lax.broadcasted_iota(jnp.int32, (1, 128), 1)
    o_ref[...] = jnp.where(lane == 0, partial, 0.0)


def ce_label_smooth_loss(logits, targets, *, epsilon=0.15, tile_cols=None,
                         target_block_bytes=8 * 1024 * 1024, min_grid_tiles=4,
                         class_major=False, allow_input_fusion=True):
    """logits: (N, C) float (or (C, N) if class_major=True); targets: (N,) int.

    Returns scalar float32 loss = mean over N of the label-smoothed CE.
    """
    if class_major:
        c, n = logits.shape
        xT = logits                                  # already (C, N): no relayout
    else:
        n, c = logits.shape
        # Class-major view. With allow_input_fusion XLA may fuse this relayout
        # into the kernel's input pipeline instead of writing a (C, N) copy.
        xT = jnp.transpose(logits)
    assert c >= 2, "label smoothing needs at least 2 classes (eps / (C-1))"

    if not jnp.issubdtype(targets.dtype, jnp.integer):
        targets = targets.astype(jnp.int32)
    tg = targets.reshape(1, -1)                      # free reshape, dtype kept narrow
    assert tg.shape[-1] == n

    itemsize = jnp.dtype(logits.dtype).itemsize
    sublane = max(8, 32 // itemsize)                 # 8 (f32) / 16 (bf16) / 32 (i8)
    c_pad = ((c + sublane - 1) // sublane) * sublane

    if tile_cols is None:
        # Big lane-dense tiles sized from the *actual* itemsize...
        tile_cols = target_block_bytes // (c_pad * itemsize)
        # ...but keep >= min_grid_tiles grid steps when N allows it, so the grid
        # pipelines (double-buffered DMA) and shards across both v7x TensorCores.
        cap = max(128, (n // max(1, min_grid_tiles)) // 128 * 128)
        tile_cols = min(tile_cols, cap)
    n_ceil = ((n + 127) // 128) * 128
    tile_cols = min(int(tile_cols), n_ceil)
    tile_cols = max(128, (tile_cols // 128) * 128)

    num_tiles = pl.cdiv(n, tile_cols)

    kernel = functools.partial(
        _ce_ls_kernel, epsilon=float(epsilon), n_valid=n, tile_cols=tile_cols,
        needs_mask=(n % tile_cols != 0))

    in_bytes = n * c * itemsize + n * jnp.dtype(tg.dtype).itemsize
    cost = pl.CostEstimate(flops=8 * n * c,
                           transcendentals=n * c + n,
                           bytes_accessed=in_bytes + num_tiles * 128 * 4)

    partials = pl.pallas_call(
        kernel,
        out_shape=jax.ShapeDtypeStruct((1, num_tiles * 128), jnp.float32),
        grid_spec=pltpu.PrefetchScalarGridSpec(
            num_scalar_prefetch=0,
            grid=(num_tiles,),
            in_specs=[
                pl.BlockSpec((c, tile_cols), lambda i: (0, i)),
                pl.BlockSpec((1, tile_cols), lambda i: (0, i)),
            ],
            out_specs=pl.BlockSpec((1, 128), lambda i: (0, i)),
        ),
        compiler_params=pltpu.CompilerParams(
            dimension_semantics=("parallel",),       # independent tiles -> megacore
            vmem_limit_bytes=32 * 1024 * 1024,
            allow_input_fusion=[bool(allow_input_fusion)] * 2,
        ),
        cost_estimate=cost,
    )(xT, tg)

    return jnp.sum(partials) / jnp.float32(n)


def _reference(logits, targets, epsilon):
    """Pure-JAX reference mirroring the PyTorch forward."""
    c = logits.shape[-1]
    log_prob = jax.nn.log_softmax(logits.astype(jnp.float32), axis=-1)
    onehot = jax.nn.one_hot(targets, c, dtype=jnp.float32)
    weight = (jnp.full_like(log_prob, epsilon / (c - 1.0)) * (1.0 - onehot)
              + onehot * (1.0 - epsilon))
    return jnp.mean(jnp.sum(-weight * log_prob, axis=-1))


if __name__ == "__main__":
    key = jax.random.PRNGKey(0)
    k1, k2, k3, k4, k5, k6 = jax.random.split(key, 6)

    # Case 1: module defaults (classes=3), ragged batch -> single tile + edge mask.
    N1, C1, EPS1 = 37, 3, 0.15
    logits1 = jax.random.normal(k1, (N1, C1), dtype=jnp.float32)
    targets1 = jax.random.randint(k2, (N1,), 0, C1, dtype=jnp.int32)
    loss1 = jax.block_until_ready(ce_label_smooth_loss(logits1, targets1, epsilon=EPS1))
    ref1 = _reference(logits1, targets1, EPS1)
    assert jnp.allclose(loss1, ref1, atol=1e-5, rtol=1e-5), (loss1, ref1)

    # Case 2: more classes, forced small tile -> multi-tile parallel grid, ragged
    # last tile, and narrow (int8) targets widened in-kernel.
    N2, C2, EPS2 = 129, 10, 0.1
    logits2 = jax.random.normal(k3, (N2, C2), dtype=jnp.float32)
    targets2 = jax.random.randint(k4, (N2,), 0, C2).astype(jnp.int8)
    loss2 = jax.block_until_ready(
        ce_label_smooth_loss(logits2, targets2, epsilon=EPS2, tile_cols=128))
    ref2 = _reference(logits2, targets2.astype(jnp.int32), EPS2)
    assert jnp.allclose(loss2, ref2, atol=1e-5, rtol=1e-5), (loss2, ref2)

    # Case 3: batch divisible by the tile -> mask codegen skipped entirely.
    N3, C3, EPS3 = 256, 3, 0.15
    logits3 = jax.random.normal(k5, (N3, C3), dtype=jnp.float32)
    targets3 = jax.random.randint(k6, (N3,), 0, C3, dtype=jnp.int32)
    loss3 = jax.block_until_ready(
        ce_label_smooth_loss(logits3, targets3, epsilon=EPS3, tile_cols=128))
    ref3 = _reference(logits3, targets3, EPS3)
    assert jnp.allclose(loss3, ref3, atol=1e-5, rtol=1e-5), (loss3, ref3)

    print("KERNEL_OK")
</pallas_src>

<mosaic_0001>
module attributes {stable_mosaic.version = 11 : i64} {
  func.func @_ce_ls_kernel(%arg0: i32, %arg1: memref<3x128xf32, #tpu.memory_space<vmem>>, %arg2: memref<1x128xi32, #tpu.memory_space<vmem>>, %arg3: memref<1x128xf32, #tpu.memory_space<vmem>>) attributes {dimension_semantics = [#tpu.dimension_semantics<parallel>], iteration_bounds = array<i64: 1>, scalar_prefetch = 0 : i64, scratch_operands = 0 : i64, tpu.core_type = #tpu.core_type<tc>, window_params = [{transform_indices = @transform_0, window_bounds = array<i64: 3, 128>}, {transform_indices = @transform_1, window_bounds = array<i64: 1, 128>}, {transform_indices = @transform_2, window_bounds = array<i64: 1, 128>}]} {
    %c0 = arith.constant 0 : index
    %c0_0 = arith.constant 0 : index
    %0 = vector.load %arg1[%c0, %c0_0] : memref<3x128xf32, #tpu.memory_space<vmem>>, vector<3x128xf32>
    %c0_1 = arith.constant 0 : index
    %c0_2 = arith.constant 0 : index
    %1 = vector.load %arg2[%c0_1, %c0_2] : memref<1x128xi32, #tpu.memory_space<vmem>>, vector<1x128xi32>
    %cst = arith.constant dense<0xFF800000> : vector<128xf32>
    %2 = vector.multi_reduction <maximumf>, %0, %cst [0] : vector<3x128xf32> to vector<128xf32>
    %3 = vector.shape_cast %2 : vector<128xf32> to vector<1x128xf32>
    %4 = vector.broadcast %3 : vector<1x128xf32> to vector<3x128xf32>
    %5 = arith.subf %0, %4 : vector<3x128xf32>
    %6 = math.exp %5 : vector<3x128xf32>
    %cst_3 = arith.constant dense<0.000000e+00> : vector<128xf32>
    %7 = vector.multi_reduction <add>, %6, %cst_3 [0] : vector<3x128xf32> to vector<128xf32>
    %8 = vector.shape_cast %7 : vector<128xf32> to vector<1x128xf32>
    %9 = math.log %8 : vector<1x128xf32>
    %10 = arith.addf %3, %9 : vector<1x128xf32>
    %cst_4 = arith.constant dense<0.000000e+00> : vector<128xf32>
    %11 = vector.multi_reduction <add>, %0, %cst_4 [0] : vector<3x128xf32> to vector<128xf32>
    %12 = vector.shape_cast %11 : vector<128xf32> to vector<1x128xf32>
    %13 = tpu.iota {dimensions = array<i32: 0>} : vector<3x128xi32>
    %14 = vector.broadcast %1 : vector<1x128xi32> to vector<3x128xi32>
    %15 = arith.cmpi eq, %13, %14 : vector<3x128xi32>
    %cst_5 = arith.constant 0.000000e+00 : f32
    %16 = vector.broadcast %cst_5 : f32 to vector<3x128xf32>
    %17 = arith.select %15, %0, %16 : vector<3x128xi1>, vector<3x128xf32>
    %cst_6 = arith.constant dense<0.000000e+00> : vector<128xf32>
    %18 = vector.multi_reduction <add>, %17, %cst_6 [0] : vector<3x128xf32> to vector<128xf32>
    %19 = vector.shape_cast %18 : vector<128xf32> to vector<1x128xf32>
    %20 = arith.subf %19, %10 : vector<1x128xf32>
    %cst_7 = arith.constant 3.000000e+00 : f32
    %21 = vector.broadcast %cst_7 : f32 to vector<1x128xf32>
    %22 = arith.mulf %21, %10 : vector<1x128xf32>
    %23 = arith.subf %12, %22 : vector<1x128xf32>
    %cst_8 = arith.constant 8.500000e-01 : f32
    %cst_9 = arith.constant 7.500000e-02 : f32
    %24 = arith.subf %cst_8, %cst_9 : f32
    %25 = vector.broadcast %24 : f32 to vector<1x128xf32>
    %26 = arith.mulf %25, %20 : vector<1x128xf32>
    %cst_10 = arith.constant 7.500000e-02 : f32
    %27 = vector.broadcast %cst_10 : f32 to vector<1x128xf32>
    %28 = arith.mulf %27, %23 : vector<1x128xf32>
    %29 = arith.addf %26, %28 : vector<1x128xf32>
    %cst_11 = arith.constant 0.000000e+00 : f32
    %30 = vector.broadcast %cst_11 : f32 to vector<1x128xf32>
    %31 = arith.subf %30, %29 : vector<1x128xf32>
    %32 = tpu.iota {dimensions = array<i32: 1>} : vector<1x128xi32>
    %c128_i32 = arith.constant 128 : i32
    %33 = arith.muli %arg0, %c128_i32 : i32
    %34 = vector.broadcast %33 : i32 to vector<1x128xi32>
    %35 = arith.addi %32, %34 : vector<1x128xi32>
    %c37_i32 = arith.constant 37 : i32
    %36 = vector.broadcast %c37_i32 : i32 to vector<1x128xi32>
    %37 = arith.cmpi slt, %35, %36 : vector<1x128xi32>
    %cst_12 = arith.constant 0.000000e+00 : f32
    %38 = vector.broadcast %cst_12 : f32 to vector<1x128xf32>
    %39 = arith.select %37, %31, %38 : vector<1x128xi1>, vector<1x128xf32>
    %40 = vector.shape_cast %39 : vector<1x128xf32> to vector<1x1x128xf32>
    %cst_13 = arith.constant dense<0.000000e+00> : vector<1xf32>
    %41 = vector.multi_reduction <add>, %40, %cst_13 [1, 2] : vector<1x1x128xf32> to vector<1xf32>
    %42 = vector.shape_cast %41 : vector<1xf32> to vector<1x1x1xf32>
    %43 = vector.extract %42[0, 0, 0] : f32 from vector<1x1x1xf32>
    %44 = tpu.iota {dimensions = array<i32: 1>} : vector<1x128xi32>
    %c0_i32 = arith.constant 0 : i32
    %45 = vector.broadcast %c0_i32 : i32 to vector<1x128xi32>
    %46 = arith.cmpi eq, %44, %45 : vector<1x128xi32>
    %cst_14 = arith.constant 0.000000e+00 : f32
    %47 = vector.broadcast %43 : f32 to vector<1x128xf32>
    %48 = vector.broadcast %cst_14 : f32 to vector<1x128xf32>
    %49 = arith.select %46, %47, %48 : vector<1x128xi1>, vector<1x128xf32>
    %c0_15 = arith.constant 0 : index
    %c0_16 = arith.constant 0 : index
    %50 = vector.load %arg3[%c0_15, %c0_16] : memref<1x128xf32, #tpu.memory_space<vmem>>, vector<1x128xf32>
    tpu.vector_store %arg3[%c0_15, %c0_16], %49 {strides = array<i32>} : memref<1x128xf32, #tpu.memory_space<vmem>>, vector<1x128xf32>,
    return
  }
  func.func @transform_0(%arg0: i32) -> (i32, i32) {
    %c0_i32 = arith.constant 0 : i32
    %c0_i32_0 = arith.constant 0 : i32
    return %c0_i32, %arg0 : i32, i32
  }
  func.func @transform_1(%arg0: i32) -> (i32, i32) {
    %c0_i32 = arith.constant 0 : i32
    %c0_i32_0 = arith.constant 0 : i32
    return %c0_i32, %arg0 : i32, i32
  }
  func.func @transform_2(%arg0: i32) -> (i32, i32) {
    %c0_i32 = arith.constant 0 : i32
    %c0_i32_0 = arith.constant 0 : i32
    return %c0_i32, %arg0 : i32, i32
  }
}

</mosaic_0001>

<llo_original>
// kernel: tpu_custom_call.1
$region0: #{tpu_custom_call.1}
  #allocation0 [shape = 'u32[]', space=smem, size = 0x4, offset = 0x4, fixed_abs, tag = 'smem constant byte address 0x4 - core index']
  #allocation1 [shape = 'u32[144,128]{1,0:T(1,128)}', space=vmem, size = 0x12000, scoped, tag = 'internal scratch']
  %s0 = inlined_call_operand.hbm [shape: f32[3,37], index: 0, kind: input, shape index: {}]
  %s1 = inlined_call_operand.vmem [shape: s32[1,37], index: 1, kind: input, shape index: {}]
  %s2 = inlined_call_operand.hbm [shape: f32[1,128], index: 2, kind: output, shape index: {}]
  %s3 = sld [smem:[#allocation0]]
  $region22: #{tpu_custom_call.1} parent=0
    _
  %s5 = ssub.s32 1, %s3
  %s6 = scalar_select 0, %s5, %s3
  $region1: #{tpu_custom_call.1} parent=0
    #allocation2 [shape = 'u8[2048]{0}', space=vmem, size = 0x800, scoped, tag = 'input window, operand 0, single buffered']
    #allocation3 [shape = 's32[1]{0}', space=sflag, size = 0x4, scoped, tag = 'scoped memory for tpu_custom_call.1']
    #allocation4 [shape = 's32[1]{0}', space=sflag, size = 0x4, scoped, tag = 'scoped memory for tpu_custom_call.1']
    #allocation5 [shape = 'u8[512]{0}', space=vmem, size = 0x400, scoped, tag = 'output window, operand 0, single buffered']
    %7 = vsyncpa [#allocation3], 0
    %8 = vsyncpa [#allocation4], 0
    // Predicated region
    $region2: #{tpu_custom_call.1} parent=1 // pred_check
      _
    $region3: #{tpu_custom_call.1} parent=1 // pred_check_branch
      %10 = sbr.rel (0) target = $region5
    $region4: #{tpu_custom_call.1} parent=1 // pred_region
      %s12 = ssub.s32 64, 64
      %13 = vsyncadd [#allocation3], %s12
      %s15 = sshll.u32 [#allocation2], 4
      %s16 = int_to_ptr.vmem [resolvable:$true] %s15
      %18 = dma.hbm_to_vmem [thread:$0]  %s0, 64, %s16, [#allocation3]
    $region5: #{tpu_custom_call.1} parent=1 // pred_fallthru
      _
    // Predicated region
    $region6: #{tpu_custom_call.1} parent=1 // pred_check
      _
    $region7: #{tpu_custom_call.1} parent=1 // pred_check_branch
      %20 = sbr.rel (0) target = $region9
    $region8: #{tpu_custom_call.1} parent=1 // pred_region
      _
    $region9: #{tpu_custom_call.1} parent=1 // pred_fallthru
      _
    // Predicated region
    $region10: #{tpu_custom_call.1} parent=1 // pred_check
      _
    $region11: #{tpu_custom_call.1} parent=1 // pred_check_branch
      %22 = sbr.rel (0) target = $region13
    $region12: #{tpu_custom_call.1} parent=1 // pred_region
      %23 = dma.done [#allocation3], 64
    $region13: #{tpu_custom_call.1} parent=1 // pred_fallthru
      _
    %v24 = vld [vmem:[#allocation2] sm:$0x7]
    %v25 = vld [vmem:[%s1] sm:$0x1]
    %vm26 = vcmask 1042432
    %v27 = vsel %vm26, %v24, -inf
    %v28 = vrot.slane %v27, 4
    %v29 = vmax.f32 %v27, %v28
    %v30 = vrot.slane %v29, 2
    %v31 = vmax.f32 %v29, %v30
    %v32 = vrot.slane %v31, 1
    %v33 = vmax.f32 %v31, %v32
    %v34 = vsub.f32 %v24, %v33
    %v35 = vmul.f32 %v34, 1.442695
    %v36 = vpow.pop %v35
    %v37 = vsel %vm26, %v36, 0.0
    %v38 = vrot.slane %v37, 4
    %v39 = vadd.f32 %v37, %v38
    %v40 = vrot.slane %v39, 2
    %v41 = vadd.f32 %v39, %v40
    %v42 = vrot.slane %v41, 1
    %v43 = vadd.f32 %v41, %v42
    %v44 = vlog2.pop %v43
    %v45 = vmul.f32 %v44, 0.6931472
    %v46 = vadd.f32 %v33, %v45
    %v47 = vsel %vm26, %v24, 0.0
    %v48 = vrot.slane %v47, 4
    %v49 = vadd.f32 %v47, %v48
    %v50 = vrot.slane %v49, 2
    %v51 = vadd.f32 %v49, %v50
    %v52 = vrot.slane %v51, 1
    %v53 = vadd.f32 %v51, %v52
    %v54 = vlaneseq
    %v55 = vshrl.u32 %v54, 7
    %v56 = vlaneseq
    %v57 = vshrl.u32 %v56, 7
    %v58 = vsub.s32 0, %v57
    %v59 = vrot.slane %v25, %v58
    %vm60 = vcmp.eq.s32.totalorder %v55, %v59
    %v61 = vsel %vm60, %v24, 0.0
    %v62 = vsel %vm26, %v61, 0.0
    %v63 = vrot.slane %v62, 4
    %v64 = vadd.f32 %v62, %v63
    %v65 = vrot.slane %v64, 2
    %v66 = vadd.f32 %v64, %v65
    %v67 = vrot.slane %v66, 1
    %v68 = vadd.f32 %v66, %v67
    %v69 = vsub.f32 %v68, %v46
    %v70 = vmul.f32 %v46, 3.0
    %v71 = vsub.f32 %v53, %v70
    %v72 = vmul.f32 %v69, 0.77500004
    %v73 = vmul.f32 %v71, 0.075
    %v74 = vadd.f32 %v72, %v73
    %v75 = vsub.f32 0.0, %v74
    %v76 = vlaneseq
    %v77 = vand.u32 %v76, 127
    %s78 = smul.u32 0, 128
    %v79 = vstv %s78
    %v80 = vadd.s32 %v77, %v79
    %vm81 = vcmp.lt.s32.totalorder %v80, 37
    %v82 = vsel %vm81, %v75, 0.0
    %vm83 = vcmask 1040384
    %v84 = vsel %vm83, %v82, 0.0
    %85 = vadd.xlane.f32.xlu0 %v84
    %v86 = vpop.xlane.xlu0 %85
    %v87 = vrot.slane %v86, 4
    %v88 = vadd.f32 %v86, %v87
    %v89 = vrot.slane %v88, 2
    %v90 = vadd.f32 %v88, %v89
    %v91 = vrot.slane %v90, 1
    %v92 = vadd.f32 %v90, %v91
    %s93 = vtos %v92
    %vm94 = vcmp.eq.s32.totalorder %v77, 0
    %v95 = vstv %s93
    %v96 = vsel %vm94, %v95, 0.0
    %97 = vst [vmem:[#allocation5] sm:$0x1] %v96
    // Predicated region
    $region14: #{tpu_custom_call.1} parent=1 // pred_check
      _
    $region15: #{tpu_custom_call.1} parent=1 // pred_check_branch
      %99 = sbr.rel (0) target = $region17
    $region16: #{tpu_custom_call.1} parent=1 // pred_region
      %s101 = ssub.s32 16, 16
      %102 = vsyncadd [#allocation4], %s101
      %s104 = sshll.u32 [#allocation5], 4
      %s105 = int_to_ptr.vmem [resolvable:$true] %s104
      %107 = dma.vmem_to_hbm [thread:$0]  %s105, 16, %s2, [#allocation4]
    $region17: #{tpu_custom_call.1} parent=1 // pred_fallthru
      _
    // Predicated region
    $region18: #{tpu_custom_call.1} parent=1 // pred_check
      _
    $region19: #{tpu_custom_call.1} parent=1 // pred_check_branch
      %109 = sbr.rel (0) target = $region21
    $region20: #{tpu_custom_call.1} parent=1 // pred_region
      %110 = dma.done [#allocation4], 16
    $region21: #{tpu_custom_call.1} parent=1 // pred_fallthru
      _
    %111 = vsyncpa [#allocation3], 1
    %112 = vsyncpa [#allocation4], 1

</llo_original>
